<compile_context>
chip_gen: v7x
topology: tpu7x:2x2x1
jax: 0.10.0
libtpu: 0.0.40
codegen_flags: <defaults>
</compile_context>

<pallas_src>
import functools
from typing import NamedTuple

import jax
import jax.numpy as jnp
from jax.experimental import pallas as pl
from jax.experimental.pallas import tpu as pltpu

_LANE = 128


class ResBlockParams(NamedTuple):
    wcat: jax.Array      # [IN, n_out * 2 * tn] block-interleaved [W_j | Ws_j]
    bcat: jax.Array      # [1,  n_out * 2 * tn] f32 block-interleaved [b_j | bs_j]
    tn: int              # OUT-tile width (multiple of 128)
    n_out: int           # number of OUT tiles
    in_features: int
    out_features: int


def _choose_out_tile(out_pad, in_features, itemsize, *,
                     max_weight_block_bytes=8 * 2**20, max_tn=2048):
    """Largest OUT tile tn (multiple of 128, dividing out_pad) whose fused
    weight block [IN, 2*tn] stays within a per-block VMEM budget."""
    n128 = out_pad // _LANE
    for d in range(n128, 0, -1):
        if n128 % d:
            continue
        tn = d * _LANE
        if tn <= max_tn and in_features * 2 * tn * itemsize <= max_weight_block_bytes:
            return tn
    # TODO(synk): very large in_features would additionally need an IN (K) grid
    # axis with an f32 accumulator; not needed at ANN-scale feature sizes.
    return _LANE


def prepare_residual_block_params(w, b, ws, bs, *, compute_dtype=jnp.float32):
    """One-time fusion of the main + shortcut Linear params (hoisted out of the
    per-call path: weights are static in eval mode).

    w, ws: [IN, OUT] (already transposed from torch's [OUT, IN]); b, bs: [*, OUT].
    """
    w = jnp.asarray(w)
    ws = jnp.asarray(ws)
    IN, OUT = w.shape
    compute_dtype = jnp.dtype(compute_dtype)
    out_pad = pl.cdiv(OUT, _LANE) * _LANE
    tn = _choose_out_tile(out_pad, IN, compute_dtype.itemsize)
    n_out = out_pad // tn

    def pad_cols(a):
        return jnp.pad(a, ((0, 0), (0, out_pad - OUT)))

    # Block-interleave so that OUT tile j of the fused slab is [W_j | Ws_j].
    w_blk = pad_cols(w).reshape(IN, n_out, tn)
    ws_blk = pad_cols(ws).reshape(IN, n_out, tn)
    wcat = jnp.concatenate([w_blk, ws_blk], axis=2).reshape(IN, n_out * 2 * tn)
    wcat = wcat.astype(compute_dtype)

    b_blk = pad_cols(jnp.asarray(b).reshape(1, -1)).reshape(1, n_out, tn)
    bs_blk = pad_cols(jnp.asarray(bs).reshape(1, -1)).reshape(1, n_out, tn)
    bcat = jnp.concatenate([b_blk, bs_blk], axis=2).reshape(1, n_out * 2 * tn)
    bcat = bcat.astype(jnp.float32)          # bias-add / ReLU epilogue stays f32

    return ResBlockParams(wcat, bcat, tn, n_out, IN, OUT)


def _resblock_kernel(x_ref, wcat_ref, bcat_ref, o_ref, *, tn):
    # x: (TB, IN); wcat: (IN, 2*tn) compute dtype; bcat: (1, 2*tn) f32.
    x = x_ref[...]
    w = wcat_ref[...]
    if x.dtype != w.dtype:
        x = x.astype(w.dtype)           # in-kernel cast: free VPU work, no extra HBM pass
    # One fused MXU matmul covers both the main and the shortcut Linear.
    r = jnp.dot(x, w, preferred_element_type=jnp.float32)
    r = r + bcat_ref[...]               # f32 bias add on the VPU
    h = jnp.maximum(r[:, :tn], 0.0)     # main-branch ReLU (split at a lane boundary)
    s = r[:, tn:]                       # shortcut branch (no ReLU)
    # dropout(h) == h in eval mode
    o_ref[...] = jnp.maximum(h + s, 0.0).astype(o_ref.dtype)


def residual_block_ann(x, params: ResBlockParams, *, tile_b=256,
                       out_dtype=jnp.float32):
    """ResidualBlockANN forward. x: [B, IN]; params from prepare_residual_block_params."""
    x = jnp.asarray(x)
    B, IN = x.shape
    assert IN == params.in_features, (IN, params.in_features)
    out_dtype = jnp.dtype(out_dtype)
    tn, n_out = params.tn, params.n_out
    n_cat = 2 * tn
    out_pad = n_out * tn

    # --- batch tiling --------------------------------------------------------
    sub = 16 if out_dtype.itemsize == 2 else 8          # sublane multiple
    tile_b = max(sub, (min(int(tile_b), pl.cdiv(B, sub) * sub) // sub) * sub)
    b_ceil = pl.cdiv(B, sub) * sub
    if b_ceil >= 2 * sub:
        # >=2 grid steps: both v7x TensorCores get work, DMA overlaps compute.
        tile_b = min(tile_b, max(sub, (b_ceil // 2 // sub) * sub))
    b_pad = pl.cdiv(B, tile_b) * tile_b
    if b_pad != B:
        x = jnp.pad(x, ((0, b_pad - B), (0, 0)))
    n_b = b_pad // tile_b

    # --- VMEM budget (computed, not hardcoded) -------------------------------
    n_w_buf = 1 if n_out == 1 else 2
    need = (2 * tile_b * IN * x.dtype.itemsize                       # x tile x2
            + n_w_buf * IN * n_cat * params.wcat.dtype.itemsize      # fused weights
            + n_w_buf * n_cat * 4                                    # fused biases
            + 2 * tile_b * tn * out_dtype.itemsize                   # out tile x2
            + 2 * tile_b * n_cat * 4)                                # f32 matmul result + temps
    vmem_limit = int(min(max(need * 1.25, 32 * 2**20), 48 * 2**20))

    def run(weight_mode):
        w_kw = {} if weight_mode is None else {"pipeline_mode": weight_mode}
        return pl.pallas_call(
            functools.partial(_resblock_kernel, tn=tn),
            out_shape=jax.ShapeDtypeStruct((b_pad, out_pad), out_dtype),
            grid_spec=pltpu.PrefetchScalarGridSpec(
                num_scalar_prefetch=0,
                grid=(n_b, n_out),
                in_specs=[
                    pl.BlockSpec((tile_b, IN), lambda i, j: (i, 0)),        # x tile
                    pl.BlockSpec((IN, n_cat), lambda i, j: (0, j), **w_kw),  # fused weights
                    pl.BlockSpec((1, n_cat), lambda i, j: (0, j), **w_kw),   # fused biases
                ],
                out_specs=pl.BlockSpec((tile_b, tn), lambda i, j: (i, j)),
            ),
            compiler_params=pltpu.CompilerParams(
                dimension_semantics=("parallel", "parallel"),
                vmem_limit_bytes=vmem_limit,
            ),
        )(x, params.wcat, params.bcat)

    if n_out == 1:
        # Constant index_map => single-buffer the resident weight/bias slab.
        try:
            out = run(pl.Buffered(1))
        except Exception:
            # TODO(synk): pl.Buffered(1) unsupported on this jax build; fall back
            # to the default double-buffered (still grid-invariant) slab.
            out = run(None)
    else:
        out = run(None)

    if b_pad == B and out_pad == params.out_features:
        return out                       # already exactly (B, OUT): skip the slice copy
    return out[:B, :params.out_features]


def reference(x, w, b, ws, bs):
    h = jnp.maximum(x @ w + b, 0.0)
    s = x @ ws + bs
    return jnp.maximum(h + s, 0.0)


if __name__ == "__main__":
    key = jax.random.PRNGKey(0)
    B, IN, OUT = 16, 32, 64          # in_features=32, out_features=64, pout=0.5
    kx, kw, kb, kws, kbs = jax.random.split(key, 5)

    x = jax.random.normal(kx, (B, IN), dtype=jnp.float32)
    # PyTorch Linear weights are [out, in]; stored here as [in, out].
    bound = 1.0 / jnp.sqrt(IN)
    w = jax.random.uniform(kw, (IN, OUT), jnp.float32, -bound, bound)
    b = jax.random.uniform(kb, (1, OUT), jnp.float32, -bound, bound)
    ws = jax.random.uniform(kws, (IN, OUT), jnp.float32, -bound, bound)
    bs = jax.random.uniform(kbs, (1, OUT), jnp.float32, -bound, bound)

    ref = reference(x, w, b, ws, bs)

    # f32 path: bit-for-bit eval-mode module semantics. Params fused ONCE at init.
    params_f32 = prepare_residual_block_params(w, b, ws, bs)
    out = jax.block_until_ready(residual_block_ann(x, params_f32))
    assert out.shape == (B, OUT)
    assert jnp.allclose(out, ref, atol=1e-5, rtol=1e-5)

    # bf16 weights + in-kernel x cast, f32 accumulation/epilogue (perf option).
    params_bf16 = prepare_residual_block_params(w, b, ws, bs,
                                                compute_dtype=jnp.bfloat16)
    out_bf16 = jax.block_until_ready(residual_block_ann(x, params_bf16))
    assert out_bf16.shape == (B, OUT)
    assert jnp.allclose(out_bf16, ref, atol=5e-2, rtol=5e-2)

    print("KERNEL_OK")
</pallas_src>

<mosaic_0001>
module attributes {stable_mosaic.version = 11 : i64} {
  func.func @_resblock_kernel(%arg0: i32, %arg1: i32, %arg2: memref<8x32xf32, #tpu.memory_space<vmem>>, %arg3: memref<32x256xf32, #tpu.memory_space<vmem>>, %arg4: memref<1x256xf32, #tpu.memory_space<vmem>>, %arg5: memref<8x128xf32, #tpu.memory_space<vmem>>) attributes {dimension_semantics = [#tpu.dimension_semantics<parallel>, #tpu.dimension_semantics<parallel>], iteration_bounds = array<i64: 2, 1>, scalar_prefetch = 0 : i64, scratch_operands = 0 : i64, tpu.core_type = #tpu.core_type<tc>, window_params = [{transform_indices = @transform_0, window_bounds = array<i64: 8, 32>}, {pipeline_mode = #tpu.pipeline_mode<synchronous>, transform_indices = @transform_1, window_bounds = array<i64: 32, 256>}, {pipeline_mode = #tpu.pipeline_mode<synchronous>, transform_indices = @transform_2, window_bounds = array<i64: 1, 256>}, {transform_indices = @transform_3, window_bounds = array<i64: 8, 128>}]} {
    %c0 = arith.constant 0 : index
    %c0_0 = arith.constant 0 : index
    %0 = vector.load %arg2[%c0, %c0_0] : memref<8x32xf32, #tpu.memory_space<vmem>>, vector<8x32xf32>
    %c0_1 = arith.constant 0 : index
    %c0_2 = arith.constant 0 : index
    %1 = vector.load %arg3[%c0_1, %c0_2] : memref<32x256xf32, #tpu.memory_space<vmem>>, vector<32x256xf32>
    %cst = arith.constant dense<0.000000e+00> : vector<8x256xf32>
    %2 = tpu.matmul %0, %1, %cst {dimension_numbers = #tpu.dot_dimension_numbers<[1], [0], [0], [1], [0, 0, 1, 1], [], []>} : vector<8x32xf32>, vector<32x256xf32>, vector<8x256xf32> -> vector<8x256xf32>
    %c0_3 = arith.constant 0 : index
    %c0_4 = arith.constant 0 : index
    %3 = vector.load %arg4[%c0_3, %c0_4] : memref<1x256xf32, #tpu.memory_space<vmem>>, vector<1x256xf32>
    %4 = vector.broadcast %3 : vector<1x256xf32> to vector<8x256xf32>
    %5 = arith.addf %2, %4 : vector<8x256xf32>
    %6 = vector.extract_strided_slice %5 {offsets = [0, 0], sizes = [8, 128], strides = [1, 1]} : vector<8x256xf32> to vector<8x128xf32>
    %cst_5 = arith.constant 0.000000e+00 : f32
    %7 = vector.broadcast %cst_5 : f32 to vector<8x128xf32>
    %8 = arith.maximumf %6, %7 : vector<8x128xf32>
    %9 = vector.extract_strided_slice %5 {offsets = [0, 128], sizes = [8, 128], strides = [1, 1]} : vector<8x256xf32> to vector<8x128xf32>
    %10 = arith.addf %8, %9 : vector<8x128xf32>
    %cst_6 = arith.constant 0.000000e+00 : f32
    %11 = vector.broadcast %cst_6 : f32 to vector<8x128xf32>
    %12 = arith.maximumf %10, %11 : vector<8x128xf32>
    %c0_7 = arith.constant 0 : index
    %c0_8 = arith.constant 0 : index
    %13 = vector.load %arg5[%c0_7, %c0_8] : memref<8x128xf32, #tpu.memory_space<vmem>>, vector<8x128xf32>
    tpu.vector_store %arg5[%c0_7, %c0_8], %12 {strides = array<i32>} : memref<8x128xf32, #tpu.memory_space<vmem>>, vector<8x128xf32>,
    return
  }
  func.func @transform_0(%arg0: i32, %arg1: i32) -> (i32, i32) {
    %c0_i32 = arith.constant 0 : i32
    %c0_i32_0 = arith.constant 0 : i32
    return %arg0, %c0_i32 : i32, i32
  }
  func.func @transform_1(%arg0: i32, %arg1: i32) -> (i32, i32) {
    %c0_i32 = arith.constant 0 : i32
    %c0_i32_0 = arith.constant 0 : i32
    return %c0_i32, %arg1 : i32, i32
  }
  func.func @transform_2(%arg0: i32, %arg1: i32) -> (i32, i32) {
    %c0_i32 = arith.constant 0 : i32
    %c0_i32_0 = arith.constant 0 : i32
    return %c0_i32, %arg1 : i32, i32
  }
  func.func @transform_3(%arg0: i32, %arg1: i32) -> (i32, i32) {
    %c0_i32 = arith.constant 0 : i32
    return %arg0, %arg1 : i32, i32
  }
}

module attributes {stable_mosaic.version = 11 : i64} {
  func.func @_resblock_kernel(%arg0: i32, %arg1: i32, %arg2: memref<8x32xf32, #tpu.memory_space<vmem>>, %arg3: memref<32x256xf32, #tpu.memory_space<vmem>>, %arg4: memref<1x256xf32, #tpu.memory_space<vmem>>, %arg5: memref<8x128xf32, #tpu.memory_space<vmem>>) attributes {dimension_semantics = [#tpu.dimension_semantics<parallel>, #tpu.dimension_semantics<parallel>], iteration_bounds = array<i64: 2, 1>, scalar_prefetch = 0 : i64, scratch_operands = 0 : i64, tpu.core_type = #tpu.core_type<tc>, window_params = [{transform_indices = @transform_0, window_bounds = array<i64: 8, 32>}, {transform_indices = @transform_1, window_bounds = array<i64: 32, 256>}, {transform_indices = @transform_2, window_bounds = array<i64: 1, 256>}, {transform_indices = @transform_3, window_bounds = array<i64: 8, 128>}]} {
    %c0 = arith.constant 0 : index
    %c0_0 = arith.constant 0 : index
    %0 = vector.load %arg2[%c0, %c0_0] : memref<8x32xf32, #tpu.memory_space<vmem>>, vector<8x32xf32>
    %c0_1 = arith.constant 0 : index
    %c0_2 = arith.constant 0 : index
    %1 = vector.load %arg3[%c0_1, %c0_2] : memref<32x256xf32, #tpu.memory_space<vmem>>, vector<32x256xf32>
    %cst = arith.constant dense<0.000000e+00> : vector<8x256xf32>
    %2 = tpu.matmul %0, %1, %cst {dimension_numbers = #tpu.dot_dimension_numbers<[1], [0], [0], [1], [0, 0, 1, 1], [], []>} : vector<8x32xf32>, vector<32x256xf32>, vector<8x256xf32> -> vector<8x256xf32>
    %c0_3 = arith.constant 0 : index
    %c0_4 = arith.constant 0 : index
    %3 = vector.load %arg4[%c0_3, %c0_4] : memref<1x256xf32, #tpu.memory_space<vmem>>, vector<1x256xf32>
    %4 = vector.broadcast %3 : vector<1x256xf32> to vector<8x256xf32>
    %5 = arith.addf %2, %4 : vector<8x256xf32>
    %6 = vector.extract_strided_slice %5 {offsets = [0, 0], sizes = [8, 128], strides = [1, 1]} : vector<8x256xf32> to vector<8x128xf32>
    %cst_5 = arith.constant 0.000000e+00 : f32
    %7 = vector.broadcast %cst_5 : f32 to vector<8x128xf32>
    %8 = arith.maximumf %6, %7 : vector<8x128xf32>
    %9 = vector.extract_strided_slice %5 {offsets = [0, 128], sizes = [8, 128], strides = [1, 1]} : vector<8x256xf32> to vector<8x128xf32>
    %10 = arith.addf %8, %9 : vector<8x128xf32>
    %cst_6 = arith.constant 0.000000e+00 : f32
    %11 = vector.broadcast %cst_6 : f32 to vector<8x128xf32>
    %12 = arith.maximumf %10, %11 : vector<8x128xf32>
    %c0_7 = arith.constant 0 : index
    %c0_8 = arith.constant 0 : index
    %13 = vector.load %arg5[%c0_7, %c0_8] : memref<8x128xf32, #tpu.memory_space<vmem>>, vector<8x128xf32>
    tpu.vector_store %arg5[%c0_7, %c0_8], %12 {strides = array<i32>} : memref<8x128xf32, #tpu.memory_space<vmem>>, vector<8x128xf32>,
    return
  }
  func.func @transform_0(%arg0: i32, %arg1: i32) -> (i32, i32) {
    %c0_i32 = arith.constant 0 : i32
    %c0_i32_0 = arith.constant 0 : i32
    return %arg0, %c0_i32 : i32, i32
  }
  func.func @transform_1(%arg0: i32, %arg1: i32) -> (i32, i32) {
    %c0_i32 = arith.constant 0 : i32
    %c0_i32_0 = arith.constant 0 : i32
    return %c0_i32, %arg1 : i32, i32
  }
  func.func @transform_2(%arg0: i32, %arg1: i32) -> (i32, i32) {
    %c0_i32 = arith.constant 0 : i32
    %c0_i32_0 = arith.constant 0 : i32
    return %c0_i32, %arg1 : i32, i32
  }
  func.func @transform_3(%arg0: i32, %arg1: i32) -> (i32, i32) {
    %c0_i32 = arith.constant 0 : i32
    return %arg0, %arg1 : i32, i32
  }
}

</mosaic_0001>

<llo_original>
// kernel: tpu_custom_call.1
$region0: #{tpu_custom_call.1}
  #allocation0 [shape = 'u32[]', space=smem, size = 0x4, offset = 0x4, fixed_abs, tag = 'smem constant byte address 0x4 - core index']
  #allocation1 [shape = 'u32[144,128]{1,0:T(1,128)}', space=vmem, size = 0x12000, scoped, tag = 'internal scratch']
  %s0 = inlined_call_operand.hbm [shape: f32[16,32], index: 0, kind: input, shape index: {}]
  %s1 = inlined_call_operand.hbm [shape: f32[32,256], index: 1, kind: input, shape index: {}]
  %s2 = inlined_call_operand.vmem [shape: f32[1,256], index: 2, kind: input, shape index: {}]
  %s3 = inlined_call_operand.hbm [shape: f32[16,128], index: 3, kind: output, shape index: {}]
  %s4 = sld [smem:[#allocation0]]
  $region53: #{tpu_custom_call.1} parent=0
    _
  %s6 = ssub.s32 1, %s4
  %s7 = scalar_select 0, %s6, %s4
  $region1: #{tpu_custom_call.1} parent=0
    #allocation2 [shape = 'u8[8192]{0}', space=vmem, size = 0x2000, scoped, tag = 'input window, operand 0']
    #allocation3 [shape = 's32[2]{0}', space=sflag, size = 0x8, scoped, tag = 'scoped memory for tpu_custom_call.1']
    #allocation4 [shape = 's32[2]{0}', space=sflag, size = 0x8, scoped, tag = 'scoped memory for tpu_custom_call.1']
    #allocation5 [shape = 'u8[32768]{0}', space=vmem, size = 0x8000, scoped, tag = 'input window, operand 1, single buffered']
    #allocation6 [shape = 's32[1]{0}', space=sflag, size = 0x4, scoped, tag = 'scoped memory for tpu_custom_call.1']
    #allocation7 [shape = 'u8[8192]{0}', space=vmem, size = 0x2000, scoped, tag = 'output window, operand 0']
    %8 = vsyncpa [#allocation3], 0
    %s9 = scalar_lea.sflag [#allocation3], 1
    %10 = vsyncpa %s9, 0
    %11 = vsyncpa [#allocation6], 0
    %12 = vsyncpa [#allocation4], 0
    %s13 = scalar_lea.sflag [#allocation4], 1
    %14 = vsyncpa %s13, 0
    loop: start=0, step=1, limit=4
    $region2: #{tpu_custom_call.1} parent=1 // loop_pre_header
      _
    $region3: #{tpu_custom_call.1} parent=1 // loop_header
      %s16 = sphi 0, %s20
      %p17 = scmp.ge.s32.totalorder %s16, 4
      %s23 = sphi 0, %s35
      %s24 = sphi 0, %s31
      %s25 = sphi 0, %s23
      %s26 = sphi 0, %s24
      %s27 = sphi 0, %s25
      %s28 = sphi 0, %s26
      %s38 = sphi 0, %s40
      %s41 = sphi 0, %s38
      %s42 = sphi 0, %s41
      %s58 = sphi 0, %s42
      %s64 = sphi 0, %s66
      %s67 = sphi 0, %s64
      %s68 = sphi 0, %s67
      %s84 = sphi 0, %s68
      %s90 = sphi 0, %s92
      %s93 = sphi 0, %s90
      %s94 = sphi 0, %s93
      %s110 = sphi 0, %s94
      %s118 = sphi 0, %s120
      %s121 = sphi 0, %s118
      %s122 = sphi 0, %s121
      %s138 = sphi 0, %s122
    $region4: #{tpu_custom_call.1} parent=1 // loop_header_branch
      %19 = sbr.rel (%p17) target = $region8
    $region5: #{tpu_custom_call.1} parent=1 // loop_body
      %s21 = ssub.s32 %s16, 1
      %s22 = ssub.s32 %s16, 2
      %s29 = sadd.s32 1, %s24
      %p30 = scmp.ge.s32.totalorder %s29, 1
      %s31 = scalar_select %p30, 0, %s29
      %s32 = sadd.s32 1, %s23
      %s33 = scalar_select %p30, %s32, %s23
      %p34 = scmp.ge.s32.totalorder %s33, 2
      %s35 = scalar_select %p34, 0, %s33
      %s36 = ssub.s32 %s23, %s35
      %p37 = scmp.eq.s32.totalorder %s36, 0
      %s39 = sadd.s32 %s38, 1
      %s40 = scalar_select %p37, %s38, %s39
      %p43 = pneg %p37
      %p44 = scmp.eq.s32.totalorder %s16, 1
      %p45 = por %p43, %p44
      %p46 = scmp.ne.s32.totalorder %s38, %s41
      %p47 = scmp.eq.s32.totalorder %s16, 0
      %p48 = por %p46, %p47
      %p49 = scmp.ne.s32.totalorder %s38, %s41
      %p50 = scmp.eq.s32.totalorder %s21, 1
      %p51 = por %p49, %p50
      %p52 = scmp.ne.s32.totalorder %s41, %s42
      %p53 = scmp.eq.s32.totalorder %s21, 0
      %p54 = por %p52, %p53
      %p55 = scmp.ne.s32.totalorder %s41, %s42
      %p56 = scmp.eq.s32.totalorder %s22, 1
      %p57 = por %p55, %p56
      %p59 = scmp.ne.s32.totalorder %s42, %s58
      %p60 = scmp.eq.s32.totalorder %s22, 0
      %p61 = por %p59, %p60
      %s62 = ssub.s32 %s24, %s31
      %p63 = scmp.eq.s32.totalorder %s62, 0
      %s65 = sadd.s32 %s64, 1
      %s66 = scalar_select %p63, %s64, %s65
      %p69 = pneg %p63
      %p70 = scmp.eq.s32.totalorder %s16, 1
      %p71 = por %p69, %p70
      %p72 = scmp.ne.s32.totalorder %s64, %s67
      %p73 = scmp.eq.s32.totalorder %s16, 0
      %p74 = por %p72, %p73
      %p75 = scmp.ne.s32.totalorder %s64, %s67
      %p76 = scmp.eq.s32.totalorder %s21, 1
      %p77 = por %p75, %p76
      %p78 = scmp.ne.s32.totalorder %s67, %s68
      %p79 = scmp.eq.s32.totalorder %s21, 0
      %p80 = por %p78, %p79
      %p81 = scmp.ne.s32.totalorder %s67, %s68
      %p82 = scmp.eq.s32.totalorder %s22, 1
      %p83 = por %p81, %p82
      %p85 = scmp.ne.s32.totalorder %s68, %s84
      %p86 = scmp.eq.s32.totalorder %s22, 0
      %p87 = por %p85, %p86
      %s88 = ssub.s32 %s24, %s31
      %p89 = scmp.eq.s32.totalorder %s88, 0
      %s91 = sadd.s32 %s90, 1
      %s92 = scalar_select %p89, %s90, %s91
      %p95 = pneg %p89
      %p96 = scmp.eq.s32.totalorder %s16, 1
      %p97 = por %p95, %p96
      %p98 = scmp.ne.s32.totalorder %s90, %s93
      %p99 = scmp.eq.s32.totalorder %s16, 0
      %p100 = por %p98, %p99
      %p101 = scmp.ne.s32.totalorder %s90, %s93
      %p102 = scmp.eq.s32.totalorder %s21, 1
      %p103 = por %p101, %p102
      %p104 = scmp.ne.s32.totalorder %s93, %s94
      %p105 = scmp.eq.s32.totalorder %s21, 0
      %p106 = por %p104, %p105
      %p107 = scmp.ne.s32.totalorder %s93, %s94
      %p108 = scmp.eq.s32.totalorder %s22, 1
      %p109 = por %p107, %p108
      %p111 = scmp.ne.s32.totalorder %s94, %s110
      %p112 = scmp.eq.s32.totalorder %s22, 0
      %p113 = por %p111, %p112
      %s114 = ssub.s32 %s23, %s35
      %s115 = ssub.s32 %s24, %s31
      %s116 = sor.u32 %s114, %s115
      %p117 = scmp.eq.s32.totalorder %s116, 0
      %s119 = sadd.s32 %s118, 1
      %s120 = scalar_select %p117, %s118, %s119
      %p123 = pneg %p117
      %p124 = scmp.eq.s32.totalorder %s16, 1
      %p125 = por %p123, %p124
      %p126 = scmp.ne.s32.totalorder %s118, %s121
      %p127 = scmp.eq.s32.totalorder %s16, 0
      %p128 = por %p126, %p127
      %p129 = scmp.ne.s32.totalorder %s118, %s121
      %p130 = scmp.eq.s32.totalorder %s21, 1
      %p131 = por %p129, %p130
      %p132 = scmp.ne.s32.totalorder %s121, %s122
      %p133 = scmp.eq.s32.totalorder %s21, 0
      %p134 = por %p132, %p133
      %p135 = scmp.ne.s32.totalorder %s121, %s122
      %p136 = scmp.eq.s32.totalorder %s22, 1
      %p137 = por %p135, %p136
      %p139 = scmp.ne.s32.totalorder %s122, %s138
      %p140 = scmp.eq.s32.totalorder %s22, 0
      %p141 = por %p139, %p140
      %p142 = scmp.le.s32.totalorder 1, %s16
      %p143 = scmp.lt.s32.totalorder %s16, 3
      %p144 = pnand %p142, %p143
      %p145 = pneg %p144
      // Predicated region
      $region9: #{tpu_custom_call.1} parent=5 // pred_check
        _
      $region10: #{tpu_custom_call.1} parent=5 // pred_check_branch
        %147 = sbr.rel (%p144) target = $region12
      $region11: #{tpu_custom_call.1} parent=5 // pred_region
        %s148 = ssub.s32 %s16, 1
        // Predicated region
        $region13: #{tpu_custom_call.1} parent=11 // pred_check
          %p149 = pneg %p80
        $region14: #{tpu_custom_call.1} parent=11 // pred_check_branch
          %151 = sbr.rel (%p149) target = $region16
        $region15: #{tpu_custom_call.1} parent=11 // pred_region
          %s152 = smul.u32 2, %s26
          %s154 = ssub.s32 1024, 1024
          %155 = vsyncadd [#allocation6], %s154
          %s156 = smul.addr %s152, 128
          %s157 = scalar_lea.hbm %s1, %s156
          %s158 = sshll.u32 [#allocation5], 4
          %s159 = int_to_ptr.vmem [resolvable:$true] %s158
          %164 = dma.hbm_to_vmem [thread:$0]  %s157, 1024, %s159, [#allocation6], 256, 256, 16
        $region16: #{tpu_custom_call.1} parent=11 // pred_fallthru
          _
        // Predicated region
        $region17: #{tpu_custom_call.1} parent=11 // pred_check
          %p165 = pneg %p106
        $region18: #{tpu_custom_call.1} parent=11 // pred_check_branch
          %167 = sbr.rel (%p165) target = $region20
        $region19: #{tpu_custom_call.1} parent=11 // pred_region
          %s168 = smul.u32 2, %s26
          %p169 = scmp.lt.s32.totalorder %s168, 1
          %s170 = scalar_select %p169, %s168, 1
          %s171 = scalar_lea.vmem %s2, %s170
          %s172 = smul.u32 2, %s26
        $region20: #{tpu_custom_call.1} parent=11 // pred_fallthru
          _
      $region12: #{tpu_custom_call.1} parent=5 // pred_fallthru
        _
      %p173 = scmp.lt.s32.totalorder %s16, 2
      // Predicated region
      $region21: #{tpu_custom_call.1} parent=5 // pred_check
        %p174 = pneg %p173
      $region22: #{tpu_custom_call.1} parent=5 // pred_check_branch
        %176 = sbr.rel (%p174) target = $region24
      $region23: #{tpu_custom_call.1} parent=5 // pred_region
        // Predicated region
        $region25: #{tpu_custom_call.1} parent=23 // pred_check
          %p177 = pneg %p48
        $region26: #{tpu_custom_call.1} parent=23 // pred_check_branch
          %179 = sbr.rel (%p177) target = $region28
        $region27: #{tpu_custom_call.1} parent=23 // pred_region
          %s180 = sand.u32 %s38, 1
          %s181 = scalar_lea.sflag [#allocation3], %s180
          %s182 = sand.u32 %s38, 1
          %s183 = smul.addr %s182, 8
          %s184 = scalar_lea.vmem [#allocation2], %s183
          %s186 = ssub.s32 128, 128
          %187 = vsyncadd %s181, %s186
          %s188 = smul.addr %s23, 128
          %s189 = scalar_lea.hbm %s0, %s188
          %s191 = sshll.u32 %s184, 4
          %s192 = int_to_ptr.vmem [resolvable:$true] %s191
          %194 = dma.hbm_to_vmem [thread:$0]  %s189, 128, %s192, %s181
        $region28: #{tpu_custom_call.1} parent=23 // pred_fallthru
          _
      $region24: #{tpu_custom_call.1} parent=5 // pred_fallthru
        _
      %p195 = scmp.le.s32.totalorder 1, %s16
      %p196 = scmp.lt.s32.totalorder %s16, 3
      %p197 = pnand %p195, %p196
      %p198 = pneg %p197
      // Predicated region
      $region29: #{tpu_custom_call.1} parent=5 // pred_check
        _
      $region30: #{tpu_custom_call.1} parent=5 // pred_check_branch
        %200 = sbr.rel (%p197) target = $region32
      $region31: #{tpu_custom_call.1} parent=5 // pred_region
        %s201 = ssub.s32 %s16, 1
        %s202 = sand.u32 %s41, 1
        %s203 = scalar_lea.sflag [#allocation3], %s202
        %s204 = sand.u32 %s41, 1
        %s205 = smul.addr %s204, 8
        %s206 = scalar_lea.vmem [#allocation2], %s205
        // Predicated region
        $region33: #{tpu_custom_call.1} parent=31 // pred_check
          %p207 = pneg %p54
        $region34: #{tpu_custom_call.1} parent=31 // pred_check_branch
          %209 = sbr.rel (%p207) target = $region36
        $region35: #{tpu_custom_call.1} parent=31 // pred_region
          %210 = dma.done %s203, 128
        $region36: #{tpu_custom_call.1} parent=31 // pred_fallthru
          _
        // Predicated region
        $region37: #{tpu_custom_call.1} parent=31 // pred_check
          %p211 = pneg %p80
        $region38: #{tpu_custom_call.1} parent=31 // pred_check_branch
          %213 = sbr.rel (%p211) target = $region40
        $region39: #{tpu_custom_call.1} parent=31 // pred_region
          %214 = dma.done [#allocation6], 1024
        $region40: #{tpu_custom_call.1} parent=31 // pred_fallthru
          _
        %s215 = sand.u32 %s41, 1
        %s216 = scalar_lea.sflag [#allocation3], %s215
        %s217 = sand.u32 %s41, 1
        %s218 = smul.addr %s217, 8
        %s219 = scalar_lea.vmem [#allocation2], %s218
        %p220 = pneg %p54
        %p221 = pneg %p51
        %p222 = pneg %p80
        %p223 = pneg %p77
        %s224 = smul.u32 2, %s26
        %p225 = scmp.lt.s32.totalorder %s224, 1
        %s226 = scalar_select %p225, %s224, 1
        %s227 = scalar_lea.vmem %s2, %s226
        %p228 = pneg %p106
        %p229 = pneg %p103
        %p230 = pneg %p134
        %p231 = pneg %p131
        %s232 = sand.u32 %s121, 1
        %s233 = scalar_lea.sflag [#allocation4], %s232
        %s234 = sand.u32 %s121, 1
        %s235 = smul.addr %s234, 8
        %s236 = scalar_lea.vmem [#allocation7], %s235
        %s237 = smul.u32 2, %s26
        %s238 = smul.u32 2, %s26
        %p239 = scmp.lt.s32.totalorder %s238, 1
        %s240 = scalar_select %p239, %s238, 1
        %s241 = scalar_lea.vmem %s2, %s240
        %s242 = smul.u32 2, %s26
        %v243 = vld [vmem:[%s206] sm:$0xff]
        %v244 = vld [vmem:[#allocation5] sm:$0xff]
        %v245 = vld [vmem:[#allocation5 + $0x8] sm:$0xff]
        %v246 = vld [vmem:[#allocation5 + $0x10] sm:$0xff]
        %v247 = vld [vmem:[#allocation5 + $0x18] sm:$0xff]
        %v248 = vld [vmem:[#allocation5 + $0x20] sm:$0xff]
        %v249 = vld [vmem:[#allocation5 + $0x28] sm:$0xff]
        %v250 = vld [vmem:[#allocation5 + $0x30] sm:$0xff]
        %v251 = vld [vmem:[#allocation5 + $0x38] sm:$0xff]
        %v252 = vld [vmem:[%s241] sm:$0x3]
        %v254 = vlaneseq
        %v255 = vshrl.u32 %v254, 7
        %v256 = vsub.s32 0, %v255
        %v257 = vrot.slane %v252, %v256
        %v258 = vlaneseq
        %v259 = vshrl.u32 %v258, 7
        %v260 = vsub.s32 1, %v259
        %v261 = vrot.slane %v252, %v260
        %vm264 = vcmask 261120
        %v266 = vsel %vm264, %v243, 0
        %268 = vmatprep.subr.mxu0 %v245
        %269 = vmatpush1.msra.mxu0 %v244
        %270 = vmatprep.subr.mxu0 %v247
        %271 = vmatpush1.msra.mxu0 %v246
        %272 = vmatprep.subr.mxu0 %v249
        %273 = vmatpush1.msra.mxu0 %v248
        %274 = vmatprep.subr.mxu0 %v251
        %275 = vmatpush1.msra.mxu0 %v250
        %276 = vmatprep.subr.mxu0 0.0
        %277 = vmatpush1.msra.mxu0 0.0
        %278 = vmatprep.subr.mxu0 0.0
        %279 = vmatpush1.msra.mxu0 0.0
        %280 = vmatprep.subr.mxu0 0.0
        %281 = vmatpush1.msra.mxu0 0.0
        %282 = vmatprep.subr.mxu0 0.0
        %283 = vmatpush1.msra.mxu0 0.0
        %284 = vmatprep.subr.mxu0 0.0
        %285 = vmatpush1.msra.mxu0 0.0
        %286 = vmatprep.subr.mxu0 0.0
        %287 = vmatpush1.msra.mxu0 0.0
        %288 = vmatprep.subr.mxu0 0.0
        %289 = vmatpush1.msra.mxu0 0.0
        %290 = vmatprep.subr.mxu0 0.0
        %291 = vmatpush1.msra.mxu0 0.0
        %292 = vmatprep.subr.mxu0 0.0
        %293 = vmatpush1.msra.mxu0 0.0
        %294 = vmatprep.subr.mxu0 0.0
        %295 = vmatpush1.msra.mxu0 0.0
        %296 = vmatprep.subr.mxu0 0.0
        %297 = vmatpush1.msra.mxu0 0.0
        %298 = vmatprep.subr.mxu0 0.0
        %299 = vmatpush1.msra.mxu0 0.0
        %300 = vmatprep.subr.mxu0 0.0
        %301 = vmatpush1.msra.mxu0 0.0
        %302 = vmatprep.subr.mxu0 0.0
        %303 = vmatpush1.msra.mxu0 0.0
        %304 = vmatprep.subr.mxu0 0.0
        %305 = vmatpush1.msra.mxu0 0.0
        %306 = vmatprep.subr.mxu0 0.0
        %307 = vmatpush1.msra.mxu0 0.0
        %308 = vmatprep.subr.mxu0 0.0
        %309 = vmatpush1.msra.mxu0 0.0
        %310 = vmatprep.subr.mxu0 0.0
        %311 = vmatpush1.msra.mxu0 0.0
        %312 = vmatprep.subr.mxu0 0.0
        %313 = vmatpush1.msra.mxu0 0.0
        %314 = vmatprep.subr.mxu0 0.0
        %315 = vmatpush1.msra.mxu0 0.0
        %316 = vmatprep.subr.mxu0 0.0
        %317 = vmatpush1.msra.mxu0 0.0
        %318 = vmatprep.subr.mxu0 0.0
        %319 = vmatpush1.msra.mxu0 0.0
        %320 = vmatprep.subr.mxu0 0.0
        %321 = vmatpush1.msra.mxu0 0.0
        %322 = vmatprep.subr.mxu0 0.0
        %323 = vmatpush1.msra.mxu0 0.0
        %324 = vmatprep.subr.mxu0 0.0
        %325 = vmatpush1.msra.mxu0 0.0
        %326 = vmatprep.subr.mxu0 0.0
        %327 = vmatpush1.msra.mxu0 0.0
        %328 = vmatprep.subr.mxu0 0.0
        %329 = vmatpush1.msra.mxu0 0.0
        %330 = vmatprep.subr.mxu0 0.0
        %331 = vmatpush1.msra.mxu0 0.0
        %332 = vmatprep.mubr.f32.mxu0 0.0
        %333 = vmatmul.mubr.f32.gmra.mrb[0].mxu0 %v266
        %v334 = vpop.f32.mrb[0].mxu0
        %v335 = vadd.f32 %v257, %v334
        %v336 = vpop.f32.mrb[0].mxu0
        %v337 = vadd.f32 %v261, %v336
        %338 = vdwg.mxu0
        %v339 = vmax.f32 %v335, 0.0
        %v340 = vadd.f32 %v339, %v337
        %v341 = vmax.f32 %v340, 0.0
        %342 = vst [vmem:[%s236] sm:$0xff] %v341
        %s343 = sand.u32 %s121, 1
        %s344 = scalar_lea.sflag [#allocation4], %s343
        %s345 = sand.u32 %s121, 1
        %s346 = smul.addr %s345, 8
        %s347 = scalar_lea.vmem [#allocation7], %s346
        // Predicated region
        $region41: #{tpu_custom_call.1} parent=31 // pred_check
          %p348 = pneg %p131
        $region42: #{tpu_custom_call.1} parent=31 // pred_check_branch
          %350 = sbr.rel (%p348) target = $region44
        $region43: #{tpu_custom_call.1} parent=31 // pred_region
          %s352 = ssub.s32 128, 128
          %353 = vsyncadd %s344, %s352
          %s354 = sadd.s32 %s26, %s25
          %s355 = smul.addr %s354, 128
          %s356 = scalar_lea.hbm %s3, %s355
          %s358 = sshll.u32 %s347, 4
          %s359 = int_to_ptr.vmem [resolvable:$true] %s358
          %361 = dma.vmem_to_hbm [thread:$0]  %s359, 128, %s356, %s344
        $region44: #{tpu_custom_call.1} parent=31 // pred_fallthru
          _
      $region32: #{tpu_custom_call.1} parent=5 // pred_fallthru
        _
      %p362 = scmp.le.s32.totalorder 2, %s16
      // Predicated region
      $region45: #{tpu_custom_call.1} parent=5 // pred_check
        %p363 = pneg %p362
      $region46: #{tpu_custom_call.1} parent=5 // pred_check_branch
        %365 = sbr.rel (%p363) target = $region48
      $region47: #{tpu_custom_call.1} parent=5 // pred_region
        %s366 = ssub.s32 %s16, 2
        // Predicated region
        $region49: #{tpu_custom_call.1} parent=47 // pred_check
          %p367 = pneg %p137
        $region50: #{tpu_custom_call.1} parent=47 // pred_check_branch
          %369 = sbr.rel (%p367) target = $region52
        $region51: #{tpu_custom_call.1} parent=47 // pred_region
          %s370 = sand.u32 %s122, 1
          %s371 = scalar_lea.sflag [#allocation4], %s370
          %s372 = sand.u32 %s122, 1
          %s373 = smul.addr %s372, 8
          %s374 = scalar_lea.vmem [#allocation7], %s373
          %375 = dma.done %s371, 128
        $region52: #{tpu_custom_call.1} parent=47 // pred_fallthru
          _
      $region48: #{tpu_custom_call.1} parent=5 // pred_fallthru
        _
    $region6: #{tpu_custom_call.1} parent=1 // loop_footer
      %s20 = sadd.s32 1, %s16
    $region7: #{tpu_custom_call.1} parent=1 // loop_footer_branch
      %15 = sbr.rel target = $region3
    $region8: #{tpu_custom_call.1} parent=1 // loop_exit
      _
    %376 = vsyncpa [#allocation3], 1
    %s377 = scalar_lea.sflag [#allocation3], 1
    %378 = vsyncpa %s377, 1
    %379 = vsyncpa [#allocation6], 1
    %380 = vsyncpa [#allocation4], 1
    %s381 = scalar_lea.sflag [#allocation4], 1
    %382 = vsyncpa %s381, 1

// kernel: tpu_custom_call.1
$region0: #{tpu_custom_call.1}
  #allocation0 [shape = 'u32[]', space=smem, size = 0x4, offset = 0x4, fixed_abs, tag = 'smem constant byte address 0x4 - core index']
  #allocation1 [shape = 'u32[144,128]{1,0:T(1,128)}', space=vmem, size = 0x12000, scoped, tag = 'internal scratch']
  %s0 = inlined_call_operand.hbm [shape: f32[16,32], index: 0, kind: input, shape index: {}]
  %s1 = inlined_call_operand.hbm [shape: f32[32,256], index: 1, kind: input, shape index: {}]
  %s2 = inlined_call_operand.vmem [shape: f32[1,256], index: 2, kind: input, shape index: {}]
  %s3 = inlined_call_operand.hbm [shape: f32[16,128], index: 3, kind: output, shape index: {}]
  %s4 = sld [smem:[#allocation0]]
  $region53: #{tpu_custom_call.1} parent=0
    _
  %s6 = ssub.s32 1, %s4
  %s7 = scalar_select 0, %s6, %s4
  $region1: #{tpu_custom_call.1} parent=0
    #allocation2 [shape = 'u8[8192]{0}', space=vmem, size = 0x2000, scoped, tag = 'input window, operand 0']
    #allocation3 [shape = 's32[2]{0}', space=sflag, size = 0x8, scoped, tag = 'scoped memory for tpu_custom_call.1']
    #allocation4 [shape = 's32[2]{0}', space=sflag, size = 0x8, scoped, tag = 'scoped memory for tpu_custom_call.1']
    #allocation5 [shape = 'u8[32768]{0}', space=vmem, size = 0x8000, scoped, tag = 'input window, operand 1, single buffered']
    #allocation6 [shape = 's32[1]{0}', space=sflag, size = 0x4, scoped, tag = 'scoped memory for tpu_custom_call.1']
    #allocation7 [shape = 'u8[8192]{0}', space=vmem, size = 0x2000, scoped, tag = 'output window, operand 0']
    %8 = vsyncpa [#allocation3], 0
    %s9 = scalar_lea.sflag [#allocation3], 1
    %10 = vsyncpa %s9, 0
    %11 = vsyncpa [#allocation6], 0
    %12 = vsyncpa [#allocation4], 0
    %s13 = scalar_lea.sflag [#allocation4], 1
    %14 = vsyncpa %s13, 0
    loop: start=0, step=1, limit=4
    $region2: #{tpu_custom_call.1} parent=1 // loop_pre_header
      _
    $region3: #{tpu_custom_call.1} parent=1 // loop_header
      %s16 = sphi 0, %s20
      %p17 = scmp.ge.s32.totalorder %s16, 4
      %s23 = sphi 0, %s35
      %s24 = sphi 0, %s31
      %s25 = sphi 0, %s23
      %s26 = sphi 0, %s24
      %s27 = sphi 0, %s25
      %s28 = sphi 0, %s26
      %s38 = sphi 0, %s40
      %s41 = sphi 0, %s38
      %s42 = sphi 0, %s41
      %s58 = sphi 0, %s42
      %s64 = sphi 0, %s66
      %s67 = sphi 0, %s64
      %s68 = sphi 0, %s67
      %s84 = sphi 0, %s68
      %s90 = sphi 0, %s92
      %s93 = sphi 0, %s90
      %s94 = sphi 0, %s93
      %s110 = sphi 0, %s94
      %s118 = sphi 0, %s120
      %s121 = sphi 0, %s118
      %s122 = sphi 0, %s121
      %s138 = sphi 0, %s122
    $region4: #{tpu_custom_call.1} parent=1 // loop_header_branch
      %19 = sbr.rel (%p17) target = $region8
    $region5: #{tpu_custom_call.1} parent=1 // loop_body
      %s21 = ssub.s32 %s16, 1
      %s22 = ssub.s32 %s16, 2
      %s29 = sadd.s32 1, %s24
      %p30 = scmp.ge.s32.totalorder %s29, 1
      %s31 = scalar_select %p30, 0, %s29
      %s32 = sadd.s32 1, %s23
      %s33 = scalar_select %p30, %s32, %s23
      %p34 = scmp.ge.s32.totalorder %s33, 2
      %s35 = scalar_select %p34, 0, %s33
      %s36 = ssub.s32 %s23, %s35
      %p37 = scmp.eq.s32.totalorder %s36, 0
      %s39 = sadd.s32 %s38, 1
      %s40 = scalar_select %p37, %s38, %s39
      %p43 = pneg %p37
      %p44 = scmp.eq.s32.totalorder %s16, 1
      %p45 = por %p43, %p44
      %p46 = scmp.ne.s32.totalorder %s38, %s41
      %p47 = scmp.eq.s32.totalorder %s16, 0
      %p48 = por %p46, %p47
      %p49 = scmp.ne.s32.totalorder %s38, %s41
      %p50 = scmp.eq.s32.totalorder %s21, 1
      %p51 = por %p49, %p50
      %p52 = scmp.ne.s32.totalorder %s41, %s42
      %p53 = scmp.eq.s32.totalorder %s21, 0
      %p54 = por %p52, %p53
      %p55 = scmp.ne.s32.totalorder %s41, %s42
      %p56 = scmp.eq.s32.totalorder %s22, 1
      %p57 = por %p55, %p56
      %p59 = scmp.ne.s32.totalorder %s42, %s58
      %p60 = scmp.eq.s32.totalorder %s22, 0
      %p61 = por %p59, %p60
      %s62 = ssub.s32 %s24, %s31
      %p63 = scmp.eq.s32.totalorder %s62, 0
      %s65 = sadd.s32 %s64, 1
      %s66 = scalar_select %p63, %s64, %s65
      %p69 = pneg %p63
      %p70 = scmp.eq.s32.totalorder %s16, 1
      %p71 = por %p69, %p70
      %p72 = scmp.ne.s32.totalorder %s64, %s67
      %p73 = scmp.eq.s32.totalorder %s16, 0
      %p74 = por %p72, %p73
      %p75 = scmp.ne.s32.totalorder %s64, %s67
      %p76 = scmp.eq.s32.totalorder %s21, 1
      %p77 = por %p75, %p76
      %p78 = scmp.ne.s32.totalorder %s67, %s68
      %p79 = scmp.eq.s32.totalorder %s21, 0
      %p80 = por %p78, %p79
      %p81 = scmp.ne.s32.totalorder %s67, %s68
      %p82 = scmp.eq.s32.totalorder %s22, 1
      %p83 = por %p81, %p82
      %p85 = scmp.ne.s32.totalorder %s68, %s84
      %p86 = scmp.eq.s32.totalorder %s22, 0
      %p87 = por %p85, %p86
      %s88 = ssub.s32 %s24, %s31
      %p89 = scmp.eq.s32.totalorder %s88, 0
      %s91 = sadd.s32 %s90, 1
      %s92 = scalar_select %p89, %s90, %s91
      %p95 = pneg %p89
      %p96 = scmp.eq.s32.totalorder %s16, 1
      %p97 = por %p95, %p96
      %p98 = scmp.ne.s32.totalorder %s90, %s93
      %p99 = scmp.eq.s32.totalorder %s16, 0
      %p100 = por %p98, %p99
      %p101 = scmp.ne.s32.totalorder %s90, %s93
      %p102 = scmp.eq.s32.totalorder %s21, 1
      %p103 = por %p101, %p102
      %p104 = scmp.ne.s32.totalorder %s93, %s94
      %p105 = scmp.eq.s32.totalorder %s21, 0
      %p106 = por %p104, %p105
      %p107 = scmp.ne.s32.totalorder %s93, %s94
      %p108 = scmp.eq.s32.totalorder %s22, 1
      %p109 = por %p107, %p108
      %p111 = scmp.ne.s32.totalorder %s94, %s110
      %p112 = scmp.eq.s32.totalorder %s22, 0
      %p113 = por %p111, %p112
      %s114 = ssub.s32 %s23, %s35
      %s115 = ssub.s32 %s24, %s31
      %s116 = sor.u32 %s114, %s115
      %p117 = scmp.eq.s32.totalorder %s116, 0
      %s119 = sadd.s32 %s118, 1
      %s120 = scalar_select %p117, %s118, %s119
      %p123 = pneg %p117
      %p124 = scmp.eq.s32.totalorder %s16, 1
      %p125 = por %p123, %p124
      %p126 = scmp.ne.s32.totalorder %s118, %s121
      %p127 = scmp.eq.s32.totalorder %s16, 0
      %p128 = por %p126, %p127
      %p129 = scmp.ne.s32.totalorder %s118, %s121
      %p130 = scmp.eq.s32.totalorder %s21, 1
      %p131 = por %p129, %p130
      %p132 = scmp.ne.s32.totalorder %s121, %s122
      %p133 = scmp.eq.s32.totalorder %s21, 0
      %p134 = por %p132, %p133
      %p135 = scmp.ne.s32.totalorder %s121, %s122
      %p136 = scmp.eq.s32.totalorder %s22, 1
      %p137 = por %p135, %p136
      %p139 = scmp.ne.s32.totalorder %s122, %s138
      %p140 = scmp.eq.s32.totalorder %s22, 0
      %p141 = por %p139, %p140
      %p142 = scmp.le.s32.totalorder 1, %s16
      %p143 = scmp.lt.s32.totalorder %s16, 3
      %p144 = pnand %p142, %p143
      %p145 = pneg %p144
      // Predicated region
      $region9: #{tpu_custom_call.1} parent=5 // pred_check
        _
      $region10: #{tpu_custom_call.1} parent=5 // pred_check_branch
        %147 = sbr.rel (%p144) target = $region12
      $region11: #{tpu_custom_call.1} parent=5 // pred_region
        %s148 = ssub.s32 %s16, 1
        // Predicated region
        $region13: #{tpu_custom_call.1} parent=11 // pred_check
          %p149 = pneg %p80
        $region14: #{tpu_custom_call.1} parent=11 // pred_check_branch
          %151 = sbr.rel (%p149) target = $region16
        $region15: #{tpu_custom_call.1} parent=11 // pred_region
          %s152 = smul.u32 2, %s26
          %s154 = ssub.s32 1024, 1024
          %155 = vsyncadd [#allocation6], %s154
          %s156 = smul.addr %s152, 128
          %s157 = scalar_lea.hbm %s1, %s156
          %s158 = sshll.u32 [#allocation5], 4
          %s159 = int_to_ptr.vmem [resolvable:$true] %s158
          %164 = dma.hbm_to_vmem [thread:$0]  %s157, 1024, %s159, [#allocation6], 256, 256, 16
        $region16: #{tpu_custom_call.1} parent=11 // pred_fallthru
          _
        // Predicated region
        $region17: #{tpu_custom_call.1} parent=11 // pred_check
          %p165 = pneg %p106
        $region18: #{tpu_custom_call.1} parent=11 // pred_check_branch
          %167 = sbr.rel (%p165) target = $region20
        $region19: #{tpu_custom_call.1} parent=11 // pred_region
          %s168 = smul.u32 2, %s26
          %p169 = scmp.lt.s32.totalorder %s168, 1
          %s170 = scalar_select %p169, %s168, 1
          %s171 = scalar_lea.vmem %s2, %s170
          %s172 = smul.u32 2, %s26
        $region20: #{tpu_custom_call.1} parent=11 // pred_fallthru
          _
      $region12: #{tpu_custom_call.1} parent=5 // pred_fallthru
        _
      %p173 = scmp.lt.s32.totalorder %s16, 2
      // Predicated region
      $region21: #{tpu_custom_call.1} parent=5 // pred_check
        %p174 = pneg %p173
      $region22: #{tpu_custom_call.1} parent=5 // pred_check_branch
        %176 = sbr.rel (%p174) target = $region24
      $region23: #{tpu_custom_call.1} parent=5 // pred_region
        // Predicated region
        $region25: #{tpu_custom_call.1} parent=23 // pred_check
          %p177 = pneg %p48
        $region26: #{tpu_custom_call.1} parent=23 // pred_check_branch
          %179 = sbr.rel (%p177) target = $region28
        $region27: #{tpu_custom_call.1} parent=23 // pred_region
          %s180 = sand.u32 %s38, 1
          %s181 = scalar_lea.sflag [#allocation3], %s180
          %s182 = sand.u32 %s38, 1
          %s183 = smul.addr %s182, 8
          %s184 = scalar_lea.vmem [#allocation2], %s183
          %s186 = ssub.s32 128, 128
          %187 = vsyncadd %s181, %s186
          %s188 = smul.addr %s23, 128
          %s189 = scalar_lea.hbm %s0, %s188
          %s191 = sshll.u32 %s184, 4
          %s192 = int_to_ptr.vmem [resolvable:$true] %s191
          %194 = dma.hbm_to_vmem [thread:$0]  %s189, 128, %s192, %s181
        $region28: #{tpu_custom_call.1} parent=23 // pred_fallthru
          _
      $region24: #{tpu_custom_call.1} parent=5 // pred_fallthru
        _
      %p195 = scmp.le.s32.totalorder 1, %s16
      %p196 = scmp.lt.s32.totalorder %s16, 3
      %p197 = pnand %p195, %p196
      %p198 = pneg %p197
      // Predicated region
      $region29: #{tpu_custom_call.1} parent=5 // pred_check
        _
      $region30: #{tpu_custom_call.1} parent=5 // pred_check_branch
        %200 = sbr.rel (%p197) target = $region32
      $region31: #{tpu_custom_call.1} parent=5 // pred_region
        %s201 = ssub.s32 %s16, 1
        %s202 = sand.u32 %s41, 1
        %s203 = scalar_lea.sflag [#allocation3], %s202
        %s204 = sand.u32 %s41, 1
        %s205 = smul.addr %s204, 8
        %s206 = scalar_lea.vmem [#allocation2], %s205
        // Predicated region
        $region33: #{tpu_custom_call.1} parent=31 // pred_check
          %p207 = pneg %p54
        $region34: #{tpu_custom_call.1} parent=31 // pred_check_branch
          %209 = sbr.rel (%p207) target = $region36
        $region35: #{tpu_custom_call.1} parent=31 // pred_region
          %210 = dma.done %s203, 128
        $region36: #{tpu_custom_call.1} parent=31 // pred_fallthru
          _
        // Predicated region
        $region37: #{tpu_custom_call.1} parent=31 // pred_check
          %p211 = pneg %p80
        $region38: #{tpu_custom_call.1} parent=31 // pred_check_branch
          %213 = sbr.rel (%p211) target = $region40
        $region39: #{tpu_custom_call.1} parent=31 // pred_region
          %214 = dma.done [#allocation6], 1024
        $region40: #{tpu_custom_call.1} parent=31 // pred_fallthru
          _
        %s215 = sand.u32 %s41, 1
        %s216 = scalar_lea.sflag [#allocation3], %s215
        %s217 = sand.u32 %s41, 1
        %s218 = smul.addr %s217, 8
        %s219 = scalar_lea.vmem [#allocation2], %s218
        %p220 = pneg %p54
        %p221 = pneg %p51
        %p222 = pneg %p80
        %p223 = pneg %p77
        %s224 = smul.u32 2, %s26
        %p225 = scmp.lt.s32.totalorder %s224, 1
        %s226 = scalar_select %p225, %s224, 1
        %s227 = scalar_lea.vmem %s2, %s226
        %p228 = pneg %p106
        %p229 = pneg %p103
        %p230 = pneg %p134
        %p231 = pneg %p131
        %s232 = sand.u32 %s121, 1
        %s233 = scalar_lea.sflag [#allocation4], %s232
        %s234 = sand.u32 %s121, 1
        %s235 = smul.addr %s234, 8
        %s236 = scalar_lea.vmem [#allocation7], %s235
        %s237 = smul.u32 2, %s26
        %s238 = smul.u32 2, %s26
        %p239 = scmp.lt.s32.totalorder %s238, 1
        %s240 = scalar_select %p239, %s238, 1
        %s241 = scalar_lea.vmem %s2, %s240
        %s242 = smul.u32 2, %s26
        %v243 = vld [vmem:[%s206] sm:$0xff]
        %v244 = vld [vmem:[#allocation5] sm:$0xff]
        %v245 = vld [vmem:[#allocation5 + $0x8] sm:$0xff]
        %v246 = vld [vmem:[#allocation5 + $0x10] sm:$0xff]
        %v247 = vld [vmem:[#allocation5 + $0x18] sm:$0xff]
        %v248 = vld [vmem:[#allocation5 + $0x20] sm:$0xff]
        %v249 = vld [vmem:[#allocation5 + $0x28] sm:$0xff]
        %v250 = vld [vmem:[#allocation5 + $0x30] sm:$0xff]
        %v251 = vld [vmem:[#allocation5 + $0x38] sm:$0xff]
        %v252 = vld [vmem:[%s241] sm:$0x3]
        %v254 = vlaneseq
        %v255 = vshrl.u32 %v254, 7
        %v256 = vsub.s32 0, %v255
        %v257 = vrot.slane %v252, %v256
        %v258 = vlaneseq
        %v259 = vshrl.u32 %v258, 7
        %v260 = vsub.s32 1, %v259
        %v261 = vrot.slane %v252, %v260
        %vm264 = vcmask 261120
        %v266 = vsel %vm264, %v243, 0
        %268 = vmatprep.subr.mxu0 %v245
        %269 = vmatpush1.msra.mxu0 %v244
        %270 = vmatprep.subr.mxu0 %v247
        %271 = vmatpush1.msra.mxu0 %v246
        %272 = vmatprep.subr.mxu0 %v249
        %273 = vmatpush1.msra.mxu0 %v248
        %274 = vmatprep.subr.mxu0 %v251
        %275 = vmatpush1.msra.mxu0 %v250
        %276 = vmatprep.subr.mxu0 0.0
        %277 = vmatpush1.msra.mxu0 0.0
        %278 = vmatprep.subr.mxu0 0.0
        %279 = vmatpush1.msra.mxu0 0.0
        %280 = vmatprep.subr.mxu0 0.0
        %281 = vmatpush1.msra.mxu0 0.0
        %282 = vmatprep.subr.mxu0 0.0
        %283 = vmatpush1.msra.mxu0 0.0
        %284 = vmatprep.subr.mxu0 0.0
        %285 = vmatpush1.msra.mxu0 0.0
        %286 = vmatprep.subr.mxu0 0.0
        %287 = vmatpush1.msra.mxu0 0.0
        %288 = vmatprep.subr.mxu0 0.0
        %289 = vmatpush1.msra.mxu0 0.0
        %290 = vmatprep.subr.mxu0 0.0
        %291 = vmatpush1.msra.mxu0 0.0
        %292 = vmatprep.subr.mxu0 0.0
        %293 = vmatpush1.msra.mxu0 0.0
        %294 = vmatprep.subr.mxu0 0.0
        %295 = vmatpush1.msra.mxu0 0.0
        %296 = vmatprep.subr.mxu0 0.0
        %297 = vmatpush1.msra.mxu0 0.0
        %298 = vmatprep.subr.mxu0 0.0
        %299 = vmatpush1.msra.mxu0 0.0
        %300 = vmatprep.subr.mxu0 0.0
        %301 = vmatpush1.msra.mxu0 0.0
        %302 = vmatprep.subr.mxu0 0.0
        %303 = vmatpush1.msra.mxu0 0.0
        %304 = vmatprep.subr.mxu0 0.0
        %305 = vmatpush1.msra.mxu0 0.0
        %306 = vmatprep.subr.mxu0 0.0
        %307 = vmatpush1.msra.mxu0 0.0
        %308 = vmatprep.subr.mxu0 0.0
        %309 = vmatpush1.msra.mxu0 0.0
        %310 = vmatprep.subr.mxu0 0.0
        %311 = vmatpush1.msra.mxu0 0.0
        %312 = vmatprep.subr.mxu0 0.0
        %313 = vmatpush1.msra.mxu0 0.0
        %314 = vmatprep.subr.mxu0 0.0
        %315 = vmatpush1.msra.mxu0 0.0
        %316 = vmatprep.subr.mxu0 0.0
        %317 = vmatpush1.msra.mxu0 0.0
        %318 = vmatprep.subr.mxu0 0.0
        %319 = vmatpush1.msra.mxu0 0.0
        %320 = vmatprep.subr.mxu0 0.0
        %321 = vmatpush1.msra.mxu0 0.0
        %322 = vmatprep.subr.mxu0 0.0
        %323 = vmatpush1.msra.mxu0 0.0
        %324 = vmatprep.subr.mxu0 0.0
        %325 = vmatpush1.msra.mxu0 0.0
        %326 = vmatprep.subr.mxu0 0.0
        %327 = vmatpush1.msra.mxu0 0.0
        %328 = vmatprep.subr.mxu0 0.0
        %329 = vmatpush1.msra.mxu0 0.0
        %330 = vmatprep.subr.mxu0 0.0
        %331 = vmatpush1.msra.mxu0 0.0
        %332 = vmatprep.mubr.f32.mxu0 0.0
        %333 = vmatmul.mubr.f32.gmra.mrb[0].mxu0 %v266
        %v334 = vpop.f32.mrb[0].mxu0
        %v335 = vadd.f32 %v257, %v334
        %v336 = vpop.f32.mrb[0].mxu0
        %v337 = vadd.f32 %v261, %v336
        %338 = vdwg.mxu0
        %v339 = vmax.f32 %v335, 0.0
        %v340 = vadd.f32 %v339, %v337
        %v341 = vmax.f32 %v340, 0.0
        %342 = vst [vmem:[%s236] sm:$0xff] %v341
        %s343 = sand.u32 %s121, 1
        %s344 = scalar_lea.sflag [#allocation4], %s343
        %s345 = sand.u32 %s121, 1
        %s346 = smul.addr %s345, 8
        %s347 = scalar_lea.vmem [#allocation7], %s346
        // Predicated region
        $region41: #{tpu_custom_call.1} parent=31 // pred_check
          %p348 = pneg %p131
        $region42: #{tpu_custom_call.1} parent=31 // pred_check_branch
          %350 = sbr.rel (%p348) target = $region44
        $region43: #{tpu_custom_call.1} parent=31 // pred_region
          %s352 = ssub.s32 128, 128
          %353 = vsyncadd %s344, %s352
          %s354 = sadd.s32 %s26, %s25
          %s355 = smul.addr %s354, 128
          %s356 = scalar_lea.hbm %s3, %s355
          %s358 = sshll.u32 %s347, 4
          %s359 = int_to_ptr.vmem [resolvable:$true] %s358
          %361 = dma.vmem_to_hbm [thread:$0]  %s359, 128, %s356, %s344
        $region44: #{tpu_custom_call.1} parent=31 // pred_fallthru
          _
      $region32: #{tpu_custom_call.1} parent=5 // pred_fallthru
        _
      %p362 = scmp.le.s32.totalorder 2, %s16
      // Predicated region
      $region45: #{tpu_custom_call.1} parent=5 // pred_check
        %p363 = pneg %p362
      $region46: #{tpu_custom_call.1} parent=5 // pred_check_branch
        %365 = sbr.rel (%p363) target = $region48
      $region47: #{tpu_custom_call.1} parent=5 // pred_region
        %s366 = ssub.s32 %s16, 2
        // Predicated region
        $region49: #{tpu_custom_call.1} parent=47 // pred_check
          %p367 = pneg %p137
        $region50: #{tpu_custom_call.1} parent=47 // pred_check_branch
          %369 = sbr.rel (%p367) target = $region52
        $region51: #{tpu_custom_call.1} parent=47 // pred_region
          %s370 = sand.u32 %s122, 1
          %s371 = scalar_lea.sflag [#allocation4], %s370
          %s372 = sand.u32 %s122, 1
          %s373 = smul.addr %s372, 8
          %s374 = scalar_lea.vmem [#allocation7], %s373
          %375 = dma.done %s371, 128
        $region52: #{tpu_custom_call.1} parent=47 // pred_fallthru
          _
      $region48: #{tpu_custom_call.1} parent=5 // pred_fallthru
        _
    $region6: #{tpu_custom_call.1} parent=1 // loop_footer
      %s20 = sadd.s32 1, %s16
    $region7: #{tpu_custom_call.1} parent=1 // loop_footer_branch
      %15 = sbr.rel target = $region3
    $region8: #{tpu_custom_call.1} parent=1 // loop_exit
      _
    %376 = vsyncpa [#allocation3], 1
    %s377 = scalar_lea.sflag [#allocation3], 1
    %378 = vsyncpa %s377, 1
    %379 = vsyncpa [#allocation6], 1
    %380 = vsyncpa [#allocation4], 1
    %s381 = scalar_lea.sflag [#allocation4], 1
    %382 = vsyncpa %s381, 1

</llo_original>
